<compile_context>
chip_gen: v7x
topology: tpu7x:2x2x1
jax: 0.10.0
libtpu: 0.0.40
codegen_flags: <defaults>
</compile_context>

<pallas_src>
import jax
import jax.numpy as jnp
from jax.experimental import pallas as pl
from jax.experimental.pallas import tpu as pltpu


# ----------------------------- kernels --------------------------------------


def graphconv_kernel(x_ref, dsel_ref, xsrc_ref, wr_ref, wl_ref, b_ref,
                     h_ref, acc_ref):
    """GraphConv + ReLU for one (node-tile, edge-chunk) grid step.

    Accumulates nsum_i = sum_{j->i} x_j over edge chunks via the bf16 x bf16
    scatter matmul dsel @ x[row]; on the last chunk:
        h = relu(x @ W_root + nsum @ W_rel + b)
    """
    k = pl.program_id(1)

    @pl.when(k == 0)
    def _():
        acc_ref[...] = jnp.zeros_like(acc_ref)

    acc_ref[...] += jnp.dot(dsel_ref[...], xsrc_ref[...],
                            preferred_element_type=jnp.float32)

    @pl.when(k == pl.num_programs(1) - 1)
    def _():
        h = (jnp.dot(x_ref[...], wr_ref[...], preferred_element_type=jnp.float32)
             + jnp.dot(acc_ref[...], wl_ref[...],
                       preferred_element_type=jnp.float32)
             + b_ref[...])
        h_ref[...] = jnp.maximum(h, 0.0)


def agg_fc_kernel(h2_ref, dsel_ref, msg_ref, fcwt_ref, fcwb_ref, fcb_ref,
                  out_ref, acc_ref):
    """Attention-weighted scatter aggregation + final fc head.

    msg = [coeff*h2[row] | coeff*e] is precomputed once (grid-invariant) in
    the wrapper; here we accumulate agg = dsel @ msg over edge chunks and on
    the last chunk compute
        out = (h2 + agg[:, :H]) @ fc_w_top + agg[:, H:] @ fc_w_bot + fc_b
    (split head avoids concatenating a zero block at a non-128 boundary).
    """
    k = pl.program_id(1)

    @pl.when(k == 0)
    def _():
        acc_ref[...] = jnp.zeros_like(acc_ref)

    acc_ref[...] += jnp.dot(dsel_ref[...], msg_ref[...],
                            preferred_element_type=jnp.float32)

    @pl.when(k == pl.num_programs(1) - 1)
    def _():
        hd = h2_ref.shape[-1]
        acc = acc_ref[...]
        out = (jnp.dot(h2_ref[...] + acc[:, :hd], fcwt_ref[...],
                       preferred_element_type=jnp.float32)
               + jnp.dot(acc[:, hd:], fcwb_ref[...],
                         preferred_element_type=jnp.float32)
               + fcb_ref[...])
        out_ref[...] = out


# ----------------------------- helpers ---------------------------------------


def _tile_and_pad(n, pref, align):
    """Pick a row-tile size and the zero-padded extent it divides.

    If n fits in one preferred tile, a single full-extent block is used (always
    layout-legal). Otherwise an `align`-aligned tile is used and n is padded up
    to a multiple of it (no silent fallback to huge full-array blocks).
    """
    if n <= pref:
        return n, n
    t = max(align, (pref // align) * align)
    return t, ((n + t - 1) // t) * t


def _vmem_limit_bytes(pipelined_bytes, scratch_bytes, headroom=8 << 20):
    """Per-call VMEM budget from the actual block sizes.

    Pipelined blocks are double-buffered by default; add scratch and compiler
    headroom, clamp so the limit fits every generation (v7x cores: 64 MiB).
    """
    need = 2 * pipelined_bytes + scratch_bytes + headroom
    return int(min(max(need, 16 << 20), 56 << 20))


# ----------------------------- wrapper ---------------------------------------


def att_edge_gcn(node_features, edge_indices, edge_features, params,
                 *, node_tile=256, edge_tile=1024):
    f32, bf16 = jnp.float32, jnp.bfloat16
    N, Dn = node_features.shape
    E, De = edge_features.shape
    H = params["b1"].shape[-1]
    O = params["fc_b"].shape[-1]
    row, col = edge_indices[0], edge_indices[1]

    # ---- tiles, padded extents, grid -----------------------------------------
    tn, Np = _tile_and_pad(N, node_tile, 8)      # node-row tile (parallel axis)
    te, Ep = _tile_and_pad(E, edge_tile, 128)    # edge-chunk (reduction axis)
    grid = (Np // tn, Ep // te)
    sem = ("parallel", "arbitrary")

    def pad_rows(a, rows):
        return jnp.pad(a, ((0, rows - a.shape[0]), (0, 0)))

    # ---- glue (XLA, not the hot path) ----------------------------------------
    # Destination one-hot scatter matrix, built directly in bf16 (exact 0/1);
    # padded edges get col=-1 so they scatter nowhere.
    col_p = jnp.pad(col, (0, Ep - E), constant_values=-1)
    dsel = (col_p[None, :] == jnp.arange(Np, dtype=col_p.dtype)[:, None]
            ).astype(bf16)                                              # [Np, Ep]

    x_pad = pad_rows(node_features, Np)                                 # [Np, Dn]
    x_src = pad_rows(jnp.take(node_features, row, axis=0), Ep).astype(bf16)

    OP = ((O + 127) // 128) * 128                                       # lane-dense head
    fcw_top = jnp.pad(params["fc_w"][:H], ((0, 0), (0, OP - O)))        # [H, OP]
    fcw_bot = jnp.pad(params["fc_w"][H:], ((0, 0), (0, OP - O)))        # [H, OP]
    fcb = jnp.pad(params["fc_b"], ((0, 0), (0, OP - O)))                # [1, OP]

    # ---- GraphConv layers (grid = node tiles x edge chunks) ------------------
    def graphconv(x_cur, xsrc_bf16, wr, wl, b):
        D = x_cur.shape[-1]
        pipelined = (tn * D * 4 + tn * te * 2 + te * D * 2
                     + 2 * D * H * 4 + H * 4 + tn * H * 4)
        return pl.pallas_call(
            graphconv_kernel,
            out_shape=jax.ShapeDtypeStruct((Np, H), f32),
            grid=grid,
            in_specs=[
                pl.BlockSpec((tn, D), lambda i, k: (i, 0)),    # node features
                pl.BlockSpec((tn, te), lambda i, k: (i, k)),   # dsel tile (bf16)
                pl.BlockSpec((te, D), lambda i, k: (k, 0)),    # gathered src feats
                pl.BlockSpec((D, H), lambda i, k: (0, 0)),     # W_root
                pl.BlockSpec((D, H), lambda i, k: (0, 0)),     # W_rel
                pl.BlockSpec((1, H), lambda i, k: (0, 0)),     # bias
            ],
            out_specs=pl.BlockSpec((tn, H), lambda i, k: (i, 0)),
            scratch_shapes=[pltpu.VMEM((tn, D), f32)],
            compiler_params=pltpu.CompilerParams(
                dimension_semantics=sem,
                vmem_limit_bytes=_vmem_limit_bytes(pipelined, tn * D * 4)),
        )(x_cur, dsel, xsrc_bf16, wr, wl, b)

    h1 = graphconv(x_pad, x_src, params["wr1"], params["wl1"], params["b1"])
    # dropout: eval mode -> identity
    h1_src = pad_rows(jnp.take(h1, row, axis=0), Ep).astype(bf16)       # [Ep, H]
    h2 = graphconv(h1, h1_src, params["wr2"], params["wl2"], params["b2"])

    # ---- edge branch + attention message (grid-invariant; tiny, in XLA) ------
    ef = edge_features
    esum = jax.ops.segment_sum(jnp.take(ef, row, axis=0), col, num_segments=E)
    deg = jax.ops.segment_sum(jnp.ones((E, 1), f32), col, num_segments=E)
    emean = esum / jnp.maximum(deg, 1.0)
    e = jax.nn.relu(emean @ params["sage_wl"] + params["sage_bl"]
                    + ef @ params["sage_wr"])                            # [E, H]
    et = ef @ params["att_w"] + params["att_b"]
    scores = jnp.sum(et * et, axis=1)
    scores = jnp.where(scores >= 0.0, scores, 0.01 * scores)            # LeakyReLU
    coeff = jax.nn.softmax(scores, axis=0)[:, None]                     # [E, 1]
    h2_src = jnp.take(h2, row, axis=0)                                  # [E, H]
    msg = jnp.concatenate([coeff * h2_src, coeff * e], axis=1)          # [E, 2H]
    msg = pad_rows(msg, Ep).astype(bf16)                                # [Ep, 2H]

    # ---- attention scatter + fc head (grid = node tiles x edge chunks) -------
    pipelined = (tn * H * 4 + tn * te * 2 + te * 2 * H * 2
                 + 2 * H * OP * 4 + OP * 4 + tn * OP * 4)
    out_pad = pl.pallas_call(
        agg_fc_kernel,
        out_shape=jax.ShapeDtypeStruct((Np, OP), f32),
        grid=grid,
        in_specs=[
            pl.BlockSpec((tn, H), lambda i, k: (i, 0)),        # h2 tile
            pl.BlockSpec((tn, te), lambda i, k: (i, k)),       # dsel tile (bf16)
            pl.BlockSpec((te, 2 * H), lambda i, k: (k, 0)),    # msg chunk (bf16)
            pl.BlockSpec((H, OP), lambda i, k: (0, 0)),        # fc_w top half
            pl.BlockSpec((H, OP), lambda i, k: (0, 0)),        # fc_w bottom half
            pl.BlockSpec((1, OP), lambda i, k: (0, 0)),        # fc_b
        ],
        out_specs=pl.BlockSpec((tn, OP), lambda i, k: (i, 0)),
        scratch_shapes=[pltpu.VMEM((tn, 2 * H), f32)],
        compiler_params=pltpu.CompilerParams(
            dimension_semantics=sem,
            vmem_limit_bytes=_vmem_limit_bytes(pipelined, tn * 2 * H * 4)),
    )(h2, dsel, msg, fcw_top, fcw_bot, fcb)

    return out_pad[:N, :O]


# --------------------------- reference & params ------------------------------


def reference(node_features, edge_indices, edge_features, params):
    """Pure-JAX f32 reference with identical semantics (dense formulation)."""
    N = node_features.shape[0]
    E = edge_features.shape[0]
    row, col = edge_indices[0], edge_indices[1]
    dsel = jax.nn.one_hot(col, N, dtype=jnp.float32).T
    ssel = jax.nn.one_hot(row, N, dtype=jnp.float32)
    a_n = dsel @ ssel
    a_e = jax.nn.one_hot(col, E, dtype=jnp.float32).T @ \
        jax.nn.one_hot(row, E, dtype=jnp.float32)
    deg_e = jnp.sum(a_e, axis=1, keepdims=True)

    x = node_features
    h1 = jax.nn.relu(x @ params["wr1"] + (a_n @ x) @ params["wl1"] + params["b1"])
    h2 = jax.nn.relu(h1 @ params["wr2"] + (a_n @ h1) @ params["wl2"] + params["b2"])
    emean = (a_e @ edge_features) / jnp.maximum(deg_e, 1.0)
    e = jax.nn.relu(emean @ params["sage_wl"] + params["sage_bl"]
                    + edge_features @ params["sage_wr"])
    et = edge_features @ params["att_w"] + params["att_b"]
    scores = jnp.sum(et * et, axis=1)
    scores = jnp.where(scores >= 0.0, scores, 0.01 * scores)
    coeff = jax.nn.softmax(scores, axis=0)[:, None]
    agg_n = dsel @ (coeff * (ssel @ h2))
    agg_e = dsel @ (coeff * e)
    cat = jnp.concatenate([h2 + agg_n, agg_e], axis=1)
    return cat @ params["fc_w"] + params["fc_b"]


def make_params(key, node_dim, edge_dim, hidden, out_dim):
    ks = jax.random.split(key, 16)
    f = lambda k, shape: (0.1 * jax.random.normal(k, shape)).astype(jnp.float32)
    return {
        "wr1": f(ks[0], (node_dim, hidden)),
        "wl1": f(ks[1], (node_dim, hidden)),
        "b1": f(ks[2], (1, hidden)),
        "wr2": f(ks[3], (hidden, hidden)),
        "wl2": f(ks[4], (hidden, hidden)),
        "b2": f(ks[5], (1, hidden)),
        "sage_wl": f(ks[6], (edge_dim, hidden)),
        "sage_bl": f(ks[7], (1, hidden)),
        "sage_wr": f(ks[8], (edge_dim, hidden)),
        "att_w": f(ks[9], (edge_dim, hidden)),
        "att_b": f(ks[10], (1, hidden)),
        "fc_w": f(ks[11], (2 * hidden, out_dim)),
        "fc_b": f(ks[12], (1, out_dim)),
    }


if __name__ == "__main__":
    # Small synthetic graph: N nodes, E edges (indices < N <= E so the
    # SAGEConv-on-edge-features construction in the original model is valid).
    N, E = 8, 16
    NODE_DIM, EDGE_DIM, HIDDEN, OUT_DIM = 4, 4, 32, 8

    key = jax.random.PRNGKey(0)
    k_nf, k_ef, k_src, k_dst, k_par = jax.random.split(key, 5)

    node_features = jax.random.normal(k_nf, (N, NODE_DIM), dtype=jnp.float32)
    edge_features = jax.random.normal(k_ef, (E, EDGE_DIM), dtype=jnp.float32)
    src = jax.random.randint(k_src, (E,), 0, N, dtype=jnp.int32)
    dst = jax.random.randint(k_dst, (E,), 0, N, dtype=jnp.int32)
    edge_indices = jnp.stack([src, dst], axis=0)  # [2, E]

    params = make_params(k_par, NODE_DIM, EDGE_DIM, HIDDEN, OUT_DIM)

    out = att_edge_gcn(node_features, edge_indices, edge_features, params)
    out = jax.block_until_ready(out)

    ref = reference(node_features, edge_indices, edge_features, params)
    assert out.shape == (N, OUT_DIM)
    # bf16 storage of the edge-gathered scatter operands (x[row], h1[row], msg)
    # introduces a small rounding error vs. the exact-f32 reference; the f32
    # accumulation keeps it well below 2e-2 at these scales.
    err = float(jnp.max(jnp.abs(out - ref)))
    assert jnp.allclose(out, ref, atol=2e-2, rtol=2e-2), f"mismatch: {err}"

    print("KERNEL_OK")
</pallas_src>

<mosaic_0001>
module attributes {stable_mosaic.version = 11 : i64} {
  func.func @graphconv_kernel(%arg0: i32, %arg1: i32, %arg2: memref<8x4xf32, #tpu.memory_space<vmem>>, %arg3: memref<8x16xbf16, #tpu.memory_space<vmem>>, %arg4: memref<16x4xbf16, #tpu.memory_space<vmem>>, %arg5: memref<4x32xf32, #tpu.memory_space<vmem>>, %arg6: memref<4x32xf32, #tpu.memory_space<vmem>>, %arg7: memref<1x32xf32, #tpu.memory_space<vmem>>, %arg8: memref<8x32xf32, #tpu.memory_space<vmem>>, %arg9: memref<8x4xf32, #tpu.memory_space<vmem>>) attributes {dimension_semantics = [#tpu.dimension_semantics<parallel>, #tpu.dimension_semantics<arbitrary>], iteration_bounds = array<i64: 1, 1>, scalar_prefetch = 0 : i64, scratch_operands = 1 : i64, tpu.core_type = #tpu.core_type<tc>, window_params = [{transform_indices = @transform_0, window_bounds = array<i64: 8, 4>}, {transform_indices = @transform_1, window_bounds = array<i64: 8, 16>}, {transform_indices = @transform_2, window_bounds = array<i64: 16, 4>}, {pipeline_mode = #tpu.pipeline_mode<synchronous>, transform_indices = @transform_3, window_bounds = array<i64: 4, 32>}, {pipeline_mode = #tpu.pipeline_mode<synchronous>, transform_indices = @transform_4, window_bounds = array<i64: 4, 32>}, {pipeline_mode = #tpu.pipeline_mode<synchronous>, transform_indices = @transform_5, window_bounds = array<i64: 1, 32>}, {transform_indices = @transform_6, window_bounds = array<i64: 8, 32>}]} {
    %c0_i32 = arith.constant 0 : i32
    %0 = arith.cmpi eq, %arg1, %c0_i32 : i32
    %1 = arith.extui %0 : i1 to i32
    %c0_i32_0 = arith.constant 0 : i32
    %2 = arith.cmpi ne, %1, %c0_i32_0 : i32
    scf.if %2 {
      %cst_10 = arith.constant 0.000000e+00 : f32
      %12 = vector.broadcast %cst_10 : f32 to vector<8x4xf32>
      %c0_11 = arith.constant 0 : index
      %c0_12 = arith.constant 0 : index
      %13 = vector.load %arg9[%c0_11, %c0_12] : memref<8x4xf32, #tpu.memory_space<vmem>>, vector<8x4xf32>
      tpu.vector_store %arg9[%c0_11, %c0_12], %12 {strides = array<i32>} : memref<8x4xf32, #tpu.memory_space<vmem>>, vector<8x4xf32>,
    } else {
    }
    %c0 = arith.constant 0 : index
    %c0_1 = arith.constant 0 : index
    %3 = vector.load %arg9[%c0, %c0_1] : memref<8x4xf32, #tpu.memory_space<vmem>>, vector<8x4xf32>
    %c0_2 = arith.constant 0 : index
    %c0_3 = arith.constant 0 : index
    %4 = vector.load %arg3[%c0_2, %c0_3] : memref<8x16xbf16, #tpu.memory_space<vmem>>, vector<8x16xbf16>
    %c0_4 = arith.constant 0 : index
    %c0_5 = arith.constant 0 : index
    %5 = vector.load %arg4[%c0_4, %c0_5] : memref<16x4xbf16, #tpu.memory_space<vmem>>, vector<16x4xbf16>
    %cst = arith.constant dense<0.000000e+00> : vector<8x4xf32>
    %6 = tpu.matmul %4, %5, %cst {dimension_numbers = #tpu.dot_dimension_numbers<[1], [0], [0], [1], [0, 0, 1, 1], [], []>} : vector<8x16xbf16>, vector<16x4xbf16>, vector<8x4xf32> -> vector<8x4xf32>
    %7 = arith.addf %3, %6 : vector<8x4xf32>
    %c0_6 = arith.constant 0 : index
    %c0_7 = arith.constant 0 : index
    %8 = vector.load %arg9[%c0_6, %c0_7] : memref<8x4xf32, #tpu.memory_space<vmem>>, vector<8x4xf32>
    tpu.vector_store %arg9[%c0_6, %c0_7], %7 {strides = array<i32>} : memref<8x4xf32, #tpu.memory_space<vmem>>, vector<8x4xf32>,
    %c0_i32_8 = arith.constant 0 : i32
    %9 = arith.cmpi eq, %arg1, %c0_i32_8 : i32
    %10 = arith.extui %9 : i1 to i32
    %c0_i32_9 = arith.constant 0 : i32
    %11 = arith.cmpi ne, %10, %c0_i32_9 : i32
    scf.if %11 {
      %c0_10 = arith.constant 0 : index
      %c0_11 = arith.constant 0 : index
      %12 = vector.load %arg2[%c0_10, %c0_11] : memref<8x4xf32, #tpu.memory_space<vmem>>, vector<8x4xf32>
      %c0_12 = arith.constant 0 : index
      %c0_13 = arith.constant 0 : index
      %13 = vector.load %arg5[%c0_12, %c0_13] : memref<4x32xf32, #tpu.memory_space<vmem>>, vector<4x32xf32>
      %cst_14 = arith.constant dense<0.000000e+00> : vector<8x32xf32>
      %14 = tpu.matmul %12, %13, %cst_14 {dimension_numbers = #tpu.dot_dimension_numbers<[1], [0], [0], [1], [0, 0, 1, 1], [], []>} : vector<8x4xf32>, vector<4x32xf32>, vector<8x32xf32> -> vector<8x32xf32>
      %c0_15 = arith.constant 0 : index
      %c0_16 = arith.constant 0 : index
      %15 = vector.load %arg9[%c0_15, %c0_16] : memref<8x4xf32, #tpu.memory_space<vmem>>, vector<8x4xf32>
      %c0_17 = arith.constant 0 : index
      %c0_18 = arith.constant 0 : index
      %16 = vector.load %arg6[%c0_17, %c0_18] : memref<4x32xf32, #tpu.memory_space<vmem>>, vector<4x32xf32>
      %cst_19 = arith.constant dense<0.000000e+00> : vector<8x32xf32>
      %17 = tpu.matmul %15, %16, %cst_19 {dimension_numbers = #tpu.dot_dimension_numbers<[1], [0], [0], [1], [0, 0, 1, 1], [], []>} : vector<8x4xf32>, vector<4x32xf32>, vector<8x32xf32> -> vector<8x32xf32>
      %18 = arith.addf %14, %17 : vector<8x32xf32>
      %c0_20 = arith.constant 0 : index
      %c0_21 = arith.constant 0 : index
      %19 = vector.load %arg7[%c0_20, %c0_21] : memref<1x32xf32, #tpu.memory_space<vmem>>, vector<1x32xf32>
      %20 = vector.broadcast %19 : vector<1x32xf32> to vector<8x32xf32>
      %21 = arith.addf %18, %20 : vector<8x32xf32>
      %cst_22 = arith.constant 0.000000e+00 : f32
      %22 = vector.broadcast %cst_22 : f32 to vector<8x32xf32>
      %23 = arith.maximumf %21, %22 : vector<8x32xf32>
      %c0_23 = arith.constant 0 : index
      %c0_24 = arith.constant 0 : index
      %24 = vector.load %arg8[%c0_23, %c0_24] : memref<8x32xf32, #tpu.memory_space<vmem>>, vector<8x32xf32>
      tpu.vector_store %arg8[%c0_23, %c0_24], %23 {strides = array<i32>} : memref<8x32xf32, #tpu.memory_space<vmem>>, vector<8x32xf32>,
    } else {
    }
    return
  }
  func.func @transform_0(%arg0: i32, %arg1: i32) -> (i32, i32) {
    %c0_i32 = arith.constant 0 : i32
    %c0_i32_0 = arith.constant 0 : i32
    return %arg0, %c0_i32 : i32, i32
  }
  func.func @transform_1(%arg0: i32, %arg1: i32) -> (i32, i32) {
    %c0_i32 = arith.constant 0 : i32
    return %arg0, %arg1 : i32, i32
  }
  func.func @transform_2(%arg0: i32, %arg1: i32) -> (i32, i32) {
    %c0_i32 = arith.constant 0 : i32
    %c0_i32_0 = arith.constant 0 : i32
    return %arg1, %c0_i32 : i32, i32
  }
  func.func @transform_3(%arg0: i32, %arg1: i32) -> (i32, i32) {
    %c0_i32 = arith.constant 0 : i32
    %c0_i32_0 = arith.constant 0 : i32
    %c0_i32_1 = arith.constant 0 : i32
    return %c0_i32, %c0_i32_0 : i32, i32
  }
  func.func @transform_4(%arg0: i32, %arg1: i32) -> (i32, i32) {
    %c0_i32 = arith.constant 0 : i32
    %c0_i32_0 = arith.constant 0 : i32
    %c0_i32_1 = arith.constant 0 : i32
    return %c0_i32, %c0_i32_0 : i32, i32
  }
  func.func @transform_5(%arg0: i32, %arg1: i32) -> (i32, i32) {
    %c0_i32 = arith.constant 0 : i32
    %c0_i32_0 = arith.constant 0 : i32
    %c0_i32_1 = arith.constant 0 : i32
    return %c0_i32, %c0_i32_0 : i32, i32
  }
  func.func @transform_6(%arg0: i32, %arg1: i32) -> (i32, i32) {
    %c0_i32 = arith.constant 0 : i32
    %c0_i32_0 = arith.constant 0 : i32
    return %arg0, %c0_i32 : i32, i32
  }
}

</mosaic_0001>

<llo_original>
// kernel: tpu_custom_call.1
$region0: #{tpu_custom_call.1}
  #allocation0 [shape = 'u32[]', space=smem, size = 0x4, offset = 0x4, fixed_abs, tag = 'smem constant byte address 0x4 - core index']
  #allocation1 [shape = 'u32[144,128]{1,0:T(1,128)}', space=vmem, size = 0x12000, scoped, tag = 'internal scratch']
  #allocation2 [shape = 'f32[8,4]{1,0:T(8,128)}', space=vmem, size = 0x1000, scoped, tag = 'scratch operand']
  %s0 = inlined_call_operand.vmem [shape: f32[8,4], index: 0, kind: input, shape index: {}]
  %s1 = inlined_call_operand.vmem [shape: bf16[8,16], index: 1, kind: input, shape index: {}]
  %s2 = inlined_call_operand.vmem [shape: bf16[16,4], index: 2, kind: input, shape index: {}]
  %s3 = inlined_call_operand.vmem [shape: f32[4,32], index: 3, kind: input, shape index: {}]
  %s4 = inlined_call_operand.vmem [shape: f32[4,32], index: 4, kind: input, shape index: {}]
  %s5 = inlined_call_operand.vmem [shape: f32[1,32], index: 5, kind: input, shape index: {}]
  %s6 = inlined_call_operand.hbm [shape: f32[8,32], index: 6, kind: output, shape index: {}]
  %s7 = sld [smem:[#allocation0]]
  $region42: #{tpu_custom_call.1} parent=0
    _
  %s9 = ssub.s32 1, %s7
  %s10 = scalar_select 0, %s9, %s7
  $region1: #{tpu_custom_call.1} parent=0
    #allocation3 [shape = 'u8[4096]{0}', space=vmem, size = 0x1000, scoped, tag = 'output window, operand 0, single buffered']
    #allocation4 [shape = 's32[1]{0}', space=sflag, size = 0x4, scoped, tag = 'scoped memory for tpu_custom_call.1']
    %11 = vsyncpa [#allocation4], 0
    // Predicated region
    $region2: #{tpu_custom_call.1} parent=1 // pred_check
      _
    $region3: #{tpu_custom_call.1} parent=1 // pred_check_branch
      %13 = sbr.rel (0) target = $region5
    $region4: #{tpu_custom_call.1} parent=1 // pred_region
      _
    $region5: #{tpu_custom_call.1} parent=1 // pred_fallthru
      _
    // Predicated region
    $region6: #{tpu_custom_call.1} parent=1 // pred_check
      _
    $region7: #{tpu_custom_call.1} parent=1 // pred_check_branch
      %15 = sbr.rel (0) target = $region9
    $region8: #{tpu_custom_call.1} parent=1 // pred_region
      _
    $region9: #{tpu_custom_call.1} parent=1 // pred_fallthru
      _
    // Predicated region
    $region10: #{tpu_custom_call.1} parent=1 // pred_check
      _
    $region11: #{tpu_custom_call.1} parent=1 // pred_check_branch
      %17 = sbr.rel (0) target = $region13
    $region12: #{tpu_custom_call.1} parent=1 // pred_region
      _
    $region13: #{tpu_custom_call.1} parent=1 // pred_fallthru
      _
    // Predicated region
    $region14: #{tpu_custom_call.1} parent=1 // pred_check
      _
    $region15: #{tpu_custom_call.1} parent=1 // pred_check_branch
      %19 = sbr.rel (0) target = $region17
    $region16: #{tpu_custom_call.1} parent=1 // pred_region
      _
    $region17: #{tpu_custom_call.1} parent=1 // pred_fallthru
      _
    // Predicated region
    $region18: #{tpu_custom_call.1} parent=1 // pred_check
      _
    $region19: #{tpu_custom_call.1} parent=1 // pred_check_branch
      %21 = sbr.rel (0) target = $region21
    $region20: #{tpu_custom_call.1} parent=1 // pred_region
      _
    $region21: #{tpu_custom_call.1} parent=1 // pred_fallthru
      _
    // Predicated region
    $region22: #{tpu_custom_call.1} parent=1 // pred_check
      _
    $region23: #{tpu_custom_call.1} parent=1 // pred_check_branch
      %23 = sbr.rel (0) target = $region25
    $region24: #{tpu_custom_call.1} parent=1 // pred_region
      _
    $region25: #{tpu_custom_call.1} parent=1 // pred_fallthru
      _
    %p25 = scmp.eq.s32.totalorder 0, 0
    // Predicated region
    $region26: #{tpu_custom_call.1} parent=1 // pred_check
      %p26 = pneg %p25
    $region27: #{tpu_custom_call.1} parent=1 // pred_check_branch
      %28 = sbr.rel (%p26) target = $region29
    $region28: #{tpu_custom_call.1} parent=1 // pred_region
      %vm29 = vcmask 31744
      %30 = vst.msk [vmem:[#allocation2] sm:$0xff] %vm29, 0.0
    $region29: #{tpu_custom_call.1} parent=1 // pred_fallthru
      _
    %v31 = vld [vmem:[#allocation2] sm:$0xff]
    %v32 = vld [vmem:[%s1] sm:$0xf]
    %v33 = vld [vmem:[%s2] sm:$0xf]
    %v34 = vld [vmem:[%s2 + $0x4] sm:$0xf]
    %v37 = vunpack.c.l.b16 %v33
    %v38 = vunpack.c.l.b16 %v34
    %v39 = vpack.c.b16 %v38, %v37
    %vm41 = vcmask 130048
    %v43 = vsel %vm41, %v32, 0
    %45 = vmatprep.subr.bf16.mxu0 0
    %46 = vmatpush1.bf16.msra.mxu0 %v39
    %47 = vmatprep.subr.bf16.mxu0 0
    %48 = vmatpush1.bf16.msra.mxu0 0
    %49 = vmatprep.subr.bf16.mxu0 0
    %50 = vmatpush1.bf16.msra.mxu0 0
    %51 = vmatprep.subr.bf16.mxu0 0
    %52 = vmatpush1.bf16.msra.mxu0 0
    %53 = vmatprep.subr.bf16.mxu0 0
    %54 = vmatpush1.bf16.msra.mxu0 0
    %55 = vmatprep.subr.bf16.mxu0 0
    %56 = vmatpush1.bf16.msra.mxu0 0
    %57 = vmatprep.subr.bf16.mxu0 0
    %58 = vmatpush1.bf16.msra.mxu0 0
    %59 = vmatprep.subr.bf16.mxu0 0
    %60 = vmatpush1.bf16.msra.mxu0 0
    %61 = vmatprep.subr.bf16.mxu0 0
    %62 = vmatpush1.bf16.msra.mxu0 0
    %63 = vmatprep.subr.bf16.mxu0 0
    %64 = vmatpush1.bf16.msra.mxu0 0
    %65 = vmatprep.subr.bf16.mxu0 0
    %66 = vmatpush1.bf16.msra.mxu0 0
    %67 = vmatprep.subr.bf16.mxu0 0
    %68 = vmatpush1.bf16.msra.mxu0 0
    %69 = vmatprep.subr.bf16.mxu0 0
    %70 = vmatpush1.bf16.msra.mxu0 0
    %71 = vmatprep.subr.bf16.mxu0 0
    %72 = vmatpush1.bf16.msra.mxu0 0
    %73 = vmatprep.subr.bf16.mxu0 0
    %74 = vmatpush1.bf16.msra.mxu0 0
    %75 = vmatprep.subr.bf16.mxu0 0
    %76 = vmatpush1.bf16.msra.mxu0 0
    %77 = vmatprep.mubr.bf16.mxu0 0
    %78 = vmatmul.mubr.bf16.gmra.mrb[0].mxu0 %v43
    %v79 = vpop.f32.mrb[0].mxu0
    %v80 = vadd.f32 0.0, %v79
    %v81 = vpop.f32.mrb[0].mxu0
    %v82 = vpop.f32.mrb[0].mxu0
    %v83 = vpop.f32.mrb[0].mxu0
    %84 = vdwg.mxu0
    %v85 = vadd.f32 %v31, %v80
    %vm86 = vcmask 31744
    %87 = vst.msk [vmem:[#allocation2] sm:$0xff] %vm86, %v85
    // Predicated region
    $region30: #{tpu_custom_call.1} parent=1 // pred_check
      %p88 = pneg %p25
    $region31: #{tpu_custom_call.1} parent=1 // pred_check_branch
      %90 = sbr.rel (%p88) target = $region33
    $region32: #{tpu_custom_call.1} parent=1 // pred_region
      %v91 = vld [vmem:[%s0] sm:$0xff]
      %v92 = vld [vmem:[%s3] sm:$0xf]
      %v93 = vld [vmem:[#allocation2] sm:$0xff]
      %v94 = vld [vmem:[%s4] sm:$0xf]
      %v96 = vsel %vm86, %v93, 0
      %vm98 = vcmask 1043456
      %v100 = vsel %vm98, %v94, 0
      %102 = vmatprep.subr.mxu0 0.0
      %103 = vmatpush1.msra.mxu0 %v100
      %104 = vmatprep.subr.mxu0 0.0
      %105 = vmatpush1.msra.mxu0 0.0
      %106 = vmatprep.subr.mxu0 0.0
      %107 = vmatpush1.msra.mxu0 0.0
      %108 = vmatprep.subr.mxu0 0.0
      %109 = vmatpush1.msra.mxu0 0.0
      %110 = vmatprep.subr.mxu0 0.0
      %111 = vmatpush1.msra.mxu0 0.0
      %112 = vmatprep.subr.mxu0 0.0
      %113 = vmatpush1.msra.mxu0 0.0
      %114 = vmatprep.subr.mxu0 0.0
      %115 = vmatpush1.msra.mxu0 0.0
      %116 = vmatprep.subr.mxu0 0.0
      %117 = vmatpush1.msra.mxu0 0.0
      %118 = vmatprep.subr.mxu0 0.0
      %119 = vmatpush1.msra.mxu0 0.0
      %120 = vmatprep.subr.mxu0 0.0
      %121 = vmatpush1.msra.mxu0 0.0
      %122 = vmatprep.subr.mxu0 0.0
      %123 = vmatpush1.msra.mxu0 0.0
      %124 = vmatprep.subr.mxu0 0.0
      %125 = vmatpush1.msra.mxu0 0.0
      %126 = vmatprep.subr.mxu0 0.0
      %127 = vmatpush1.msra.mxu0 0.0
      %128 = vmatprep.subr.mxu0 0.0
      %129 = vmatpush1.msra.mxu0 0.0
      %130 = vmatprep.subr.mxu0 0.0
      %131 = vmatpush1.msra.mxu0 0.0
      %132 = vmatprep.subr.mxu0 0.0
      %133 = vmatpush1.msra.mxu0 0.0
      %134 = vmatprep.subr.mxu0 0.0
      %135 = vmatpush1.msra.mxu0 0.0
      %136 = vmatprep.subr.mxu0 0.0
      %137 = vmatpush1.msra.mxu0 0.0
      %138 = vmatprep.subr.mxu0 0.0
      %139 = vmatpush1.msra.mxu0 0.0
      %140 = vmatprep.subr.mxu0 0.0
      %141 = vmatpush1.msra.mxu0 0.0
      %142 = vmatprep.subr.mxu0 0.0
      %143 = vmatpush1.msra.mxu0 0.0
      %144 = vmatprep.subr.mxu0 0.0
      %145 = vmatpush1.msra.mxu0 0.0
      %146 = vmatprep.subr.mxu0 0.0
      %147 = vmatpush1.msra.mxu0 0.0
      %148 = vmatprep.subr.mxu0 0.0
      %149 = vmatpush1.msra.mxu0 0.0
      %150 = vmatprep.subr.mxu0 0.0
      %151 = vmatpush1.msra.mxu0 0.0
      %152 = vmatprep.subr.mxu0 0.0
      %153 = vmatpush1.msra.mxu0 0.0
      %154 = vmatprep.subr.mxu0 0.0
      %155 = vmatpush1.msra.mxu0 0.0
      %156 = vmatprep.subr.mxu0 0.0
      %157 = vmatpush1.msra.mxu0 0.0
      %158 = vmatprep.subr.mxu0 0.0
      %159 = vmatpush1.msra.mxu0 0.0
      %160 = vmatprep.subr.mxu0 0.0
      %161 = vmatpush1.msra.mxu0 0.0
      %162 = vmatprep.subr.mxu0 0.0
      %163 = vmatpush1.msra.mxu0 0.0
      %164 = vmatprep.subr.mxu0 0.0
      %165 = vmatpush1.msra.mxu0 0.0
      %166 = vmatprep.mubr.f32.mxu0 0.0
      %167 = vmatmul.mubr.f32.gmra.mrb[0].mxu0 %v96
      %v168 = vpop.f32.mrb[0].mxu0
      %v169 = vadd.f32 0.0, %v168
      %v170 = vpop.f32.mrb[0].mxu0
      %171 = vdwg.mxu0
      %v173 = vsel %vm86, %v91, 0
      %v176 = vsel %vm98, %v92, 0
      %178 = vmatprep.subr.mxu0 0.0
      %179 = vmatpush1.msra.mxu0 %v176
      %180 = vmatprep.subr.mxu0 0.0
      %181 = vmatpush1.msra.mxu0 0.0
      %182 = vmatprep.subr.mxu0 0.0
      %183 = vmatpush1.msra.mxu0 0.0
      %184 = vmatprep.subr.mxu0 0.0
      %185 = vmatpush1.msra.mxu0 0.0
      %186 = vmatprep.subr.mxu0 0.0
      %187 = vmatpush1.msra.mxu0 0.0
      %188 = vmatprep.subr.mxu0 0.0
      %189 = vmatpush1.msra.mxu0 0.0
      %190 = vmatprep.subr.mxu0 0.0
      %191 = vmatpush1.msra.mxu0 0.0
      %192 = vmatprep.subr.mxu0 0.0
      %193 = vmatpush1.msra.mxu0 0.0
      %194 = vmatprep.subr.mxu0 0.0
      %195 = vmatpush1.msra.mxu0 0.0
      %196 = vmatprep.subr.mxu0 0.0
      %197 = vmatpush1.msra.mxu0 0.0
      %198 = vmatprep.subr.mxu0 0.0
      %199 = vmatpush1.msra.mxu0 0.0
      %200 = vmatprep.subr.mxu0 0.0
      %201 = vmatpush1.msra.mxu0 0.0
      %202 = vmatprep.subr.mxu0 0.0
      %203 = vmatpush1.msra.mxu0 0.0
      %204 = vmatprep.subr.mxu0 0.0
      %205 = vmatpush1.msra.mxu0 0.0
      %206 = vmatprep.subr.mxu0 0.0
      %207 = vmatpush1.msra.mxu0 0.0
      %208 = vmatprep.subr.mxu0 0.0
      %209 = vmatpush1.msra.mxu0 0.0
      %210 = vmatprep.subr.mxu0 0.0
      %211 = vmatpush1.msra.mxu0 0.0
      %212 = vmatprep.subr.mxu0 0.0
      %213 = vmatpush1.msra.mxu0 0.0
      %214 = vmatprep.subr.mxu0 0.0
      %215 = vmatpush1.msra.mxu0 0.0
      %216 = vmatprep.subr.mxu0 0.0
      %217 = vmatpush1.msra.mxu0 0.0
      %218 = vmatprep.subr.mxu0 0.0
      %219 = vmatpush1.msra.mxu0 0.0
      %220 = vmatprep.subr.mxu0 0.0
      %221 = vmatpush1.msra.mxu0 0.0
      %222 = vmatprep.subr.mxu0 0.0
      %223 = vmatpush1.msra.mxu0 0.0
      %224 = vmatprep.subr.mxu0 0.0
      %225 = vmatpush1.msra.mxu0 0.0
      %226 = vmatprep.subr.mxu0 0.0
      %227 = vmatpush1.msra.mxu0 0.0
      %228 = vmatprep.subr.mxu0 0.0
      %229 = vmatpush1.msra.mxu0 0.0
      %230 = vmatprep.subr.mxu0 0.0
      %231 = vmatpush1.msra.mxu0 0.0
      %232 = vmatprep.subr.mxu0 0.0
      %233 = vmatpush1.msra.mxu0 0.0
      %234 = vmatprep.subr.mxu0 0.0
      %235 = vmatpush1.msra.mxu0 0.0
      %236 = vmatprep.subr.mxu0 0.0
      %237 = vmatpush1.msra.mxu0 0.0
      %238 = vmatprep.subr.mxu0 0.0
      %239 = vmatpush1.msra.mxu0 0.0
      %240 = vmatprep.subr.mxu0 0.0
      %241 = vmatpush1.msra.mxu0 0.0
      %242 = vmatprep.mubr.f32.mxu0 0.0
      %243 = vmatmul.mubr.f32.gmra.mrb[0].mxu0 %v173
      %v244 = vpop.f32.mrb[0].mxu0
      %v245 = vadd.f32 %v169, %v244
      %v246 = vpop.f32.mrb[0].mxu0
      %247 = vdwg.mxu0
      %v248 = vld [vmem:[%s5] sm:$0x1]
      %v250 = vlaneseq
      %v251 = vshrl.u32 %v250, 7
      %v252 = vsub.s32 0, %v251
      %v253 = vrot.slane %v248, %v252
      %v255 = vadd.f32 %v245, %v253
      %v256 = vmax.f32 %v255, 0.0
      %vm257 = vcmask 261120
      %258 = vst.msk [vmem:[#allocation3] sm:$0xff] %vm257, %v256
    $region33: #{tpu_custom_call.1} parent=1 // pred_fallthru
      _
    // Predicated region
    $region34: #{tpu_custom_call.1} parent=1 // pred_check
      _
    $region35: #{tpu_custom_call.1} parent=1 // pred_check_branch
      %260 = sbr.rel (0) target = $region37
    $region36: #{tpu_custom_call.1} parent=1 // pred_region
      %s262 = ssub.s32 128, 128
      %263 = vsyncadd [#allocation4], %s262
      %s265 = sshll.u32 [#allocation3], 4
      %s266 = int_to_ptr.vmem [resolvable:$true] %s265
      %268 = dma.vmem_to_hbm [thread:$0]  %s266, 128, %s6, [#allocation4]
    $region37: #{tpu_custom_call.1} parent=1 // pred_fallthru
      _
    // Predicated region
    $region38: #{tpu_custom_call.1} parent=1 // pred_check
      _
    $region39: #{tpu_custom_call.1} parent=1 // pred_check_branch
      %270 = sbr.rel (0) target = $region41
    $region40: #{tpu_custom_call.1} parent=1 // pred_region
      %271 = dma.done [#allocation4], 128
    $region41: #{tpu_custom_call.1} parent=1 // pred_fallthru
      _
    %272 = vsyncpa [#allocation4], 1

</llo_original>
